<compile_context>
chip_gen: v7x
topology: tpu7x:2x2x1
jax: 0.10.0
libtpu: 0.0.40
codegen_flags: <defaults>
</compile_context>

<pallas_src>
import functools

import jax
import jax.numpy as jnp
from jax.experimental import pallas as pl
from jax.experimental.pallas import tpu as pltpu


def _ce_kernel(preds_ref, tgt_ref, loss_ref,
               m_ref, l_ref, sx_ref,
               *, eps: float, num_classes: int, tc: int, mask_classes: bool):
    ci = pl.program_id(1)
    n_ci = pl.num_programs(1)

    x = preds_ref[...].astype(jnp.float32)            # (tn, tc) upcast in-kernel

    eps_div = eps / (num_classes - 1) if num_classes > 1 else 0.0
    coef_t = 1.0 - eps - eps_div
    need_sum = eps_div != 0.0

    if mask_classes:
        # Global class index of each lane in this tile; mask padded classes.
        lane = jax.lax.broadcasted_iota(jnp.int32, (1, tc), 1)
        valid = lane < (num_classes - ci * tc)
        x_lse = jnp.where(valid, x, -jnp.inf)
        x_sum = jnp.where(valid, x, 0.0) if need_sum else x
    else:
        x_lse = x
        x_sum = x

    @pl.when(ci == 0)
    def _init():
        m_ref[...] = jnp.full(m_ref.shape, -jnp.inf, jnp.float32)
        l_ref[...] = jnp.zeros(l_ref.shape, jnp.float32)
        if need_sum:
            sx_ref[...] = jnp.zeros(sx_ref.shape, jnp.float32)

    # ---- online logsumexp over the class (lane) axis --------------------
    tile_max = jnp.max(x_lse, axis=1, keepdims=True)                  # (tn, 1)
    m_new = jnp.maximum(m_ref[...], tile_max)
    l_ref[...] = jnp.exp(m_ref[...] - m_new) * l_ref[...] + jnp.sum(
        jnp.exp(x_lse - m_new), axis=1, keepdims=True)
    m_ref[...] = m_new

    # ---- running sum of logits (only needed for the smoothing term) -----
    if need_sum:
        sx_ref[...] += jnp.sum(x_sum, axis=1, keepdims=True)

    # ---- finalize at the last class tile ---------------------------------
    @pl.when(ci == n_ci - 1)
    def _finalize():
        lse = m_ref[...] + jnp.log(l_ref[...])                        # (tn, 1)
        lp_t = tgt_ref[...] - lse                                     # log p[gt]
        if need_sum:
            sum_lp = sx_ref[...] - float(num_classes) * lse
            loss_ref[...] = -(coef_t * lp_t + eps_div * sum_lp)
        else:
            loss_ref[...] = -(coef_t * lp_t)


def _round_up(x: int, a: int) -> int:
    return ((x + a - 1) // a) * a


def _cdiv(x: int, a: int) -> int:
    return (x + a - 1) // a


def cross_entropy_loss(preds, gts, smoothing=True, *,
                       tn_pref: int = 256,
                       tc_pref: int | None = None,
                       target_block_bytes: int = 8 * 1024 * 1024):
    """preds: [N, C] float (f32 or bf16), gts: [N] int.  Returns scalar f32 loss."""
    n, c = preds.shape
    eps = 0.2 if smoothing else 0.0
    itemsize = jnp.dtype(preds.dtype).itemsize

    # Target logit gathered in the wrapper (true N-element gather, no one-hot).
    gts_col = gts.reshape(-1).astype(jnp.int32)[:, None]
    tgt = jnp.take_along_axis(preds, gts_col, axis=1).astype(jnp.float32)  # (N, 1)

    # ---- tile selection ---------------------------------------------------
    row_align = max(8, 32 // itemsize)       # 8 for f32, 16 for bf16, 32 for 8-bit
    lane_align = 128

    tn = min(_round_up(n, row_align), max(row_align, _round_up(tn_pref, row_align)))
    # Ensure >=2 N tiles when possible so v7x's second TensorCore gets work.
    if _cdiv(n, tn) < 2 and n > row_align:
        tn = max(row_align, _round_up(_cdiv(n, 2), row_align))

    if tc_pref is None:
        tc_pref = max(lane_align,
                      (target_block_bytes // (tn * itemsize)) // lane_align * lane_align)
    else:
        tc_pref = max(lane_align, _round_up(tc_pref, lane_align))

    if c <= tc_pref:
        tc = c                     # single class block (full-dim block, no masking)
    else:
        tc = tc_pref               # 128-aligned streaming tile; last block masked
    mask_classes = (c % tc) != 0

    grid = (_cdiv(n, tn), _cdiv(c, tc))

    # ---- VMEM budget: double-buffered preds block + scratch + headroom ----
    block_bytes = tn * tc * itemsize
    vmem_limit = int(min(96 * 1024 * 1024,
                         max(32 * 1024 * 1024, 2 * block_bytes + 8 * 1024 * 1024)))

    kernel = functools.partial(_ce_kernel, eps=eps, num_classes=c, tc=tc,
                               mask_classes=mask_classes)

    cost = pl.CostEstimate(
        flops=5 * n * c,
        transcendentals=n * c,
        bytes_accessed=n * c * itemsize + 2 * n * 4,
    )

    per_row = pl.pallas_call(
        kernel,
        out_shape=jax.ShapeDtypeStruct((n, 1), jnp.float32),
        grid_spec=pltpu.PrefetchScalarGridSpec(
            num_scalar_prefetch=0,
            grid=grid,
            in_specs=[
                pl.BlockSpec((tn, tc), lambda ni, ci: (ni, ci)),
                # target logit block index is constant across the C loop.
                pl.BlockSpec((tn, 1), lambda ni, ci: (ni, 0)),
            ],
            out_specs=pl.BlockSpec((tn, 1), lambda ni, ci: (ni, 0)),
            scratch_shapes=[pltpu.VMEM((tn, 1), jnp.float32)] * 3,
        ),
        compiler_params=pltpu.CompilerParams(
            dimension_semantics=("parallel", "arbitrary"),
            vmem_limit_bytes=vmem_limit,
        ),
        cost_estimate=cost,
    )(preds, tgt)

    return jnp.mean(per_row)


def _reference(preds, gts, smoothing=True):
    # pure-JAX reference mirroring the PyTorch module
    preds = preds.astype(jnp.float32)
    n, c = preds.shape
    log_prb = jax.nn.log_softmax(preds, axis=1)
    one_hot = jax.nn.one_hot(gts, c, dtype=jnp.float32)
    if smoothing:
        eps = 0.2
        one_hot = one_hot * (1 - eps) + (1 - one_hot) * eps / (c - 1)
    return -(one_hot * log_prb).sum(axis=1).mean()


if __name__ == "__main__":
    key = jax.random.PRNGKey(0)
    k1, k2, k3, k4, k5, k6 = jax.random.split(key, 6)

    # Small shape consistent with the module: batch=8, classes=32 (f32).
    N, C = 8, 32
    preds = jax.random.normal(k1, (N, C), dtype=jnp.float32)
    gts = jax.random.randint(k2, (N,), 0, C, dtype=jnp.int32)

    loss = cross_entropy_loss(preds, gts, smoothing=True)
    jax.block_until_ready(loss)
    ref = _reference(preds, gts, smoothing=True)
    assert jnp.allclose(loss, ref, atol=2e-5, rtol=2e-5), (loss, ref)

    # Plain (un-smoothed) cross-entropy path.
    loss_ns = cross_entropy_loss(preds, gts, smoothing=False)
    jax.block_until_ready(loss_ns)
    ref_ns = _reference(preds, gts, smoothing=False)
    assert jnp.allclose(loss_ns, ref_ns, atol=2e-5, rtol=2e-5), (loss_ns, ref_ns)

    # Gridded online-logsumexp path with bf16 input, non-128-multiple C
    # (pad+mask path), multiple N and C tiles.
    N2, C2 = 48, 500
    preds2 = jax.random.normal(k3, (N2, C2), dtype=jnp.bfloat16)
    gts2 = jax.random.randint(k4, (N2,), 0, C2, dtype=jnp.int32)
    loss2 = cross_entropy_loss(preds2, gts2, smoothing=True, tn_pref=8, tc_pref=128)
    jax.block_until_ready(loss2)
    ref2 = _reference(preds2, gts2, smoothing=True)
    assert jnp.allclose(loss2, ref2, atol=2e-3, rtol=2e-3), (loss2, ref2)

    # Partial last N block (N=10) + masked class tiles, f32.
    N3, C3 = 10, 300
    preds3 = jax.random.normal(k5, (N3, C3), dtype=jnp.float32)
    gts3 = jax.random.randint(k6, (N3,), 0, C3, dtype=jnp.int32)
    loss3 = cross_entropy_loss(preds3, gts3, smoothing=True, tn_pref=8, tc_pref=128)
    jax.block_until_ready(loss3)
    ref3 = _reference(preds3, gts3, smoothing=True)
    assert jnp.allclose(loss3, ref3, atol=1e-4, rtol=1e-4), (loss3, ref3)

    print("KERNEL_OK")
</pallas_src>

<mosaic_0001>
module attributes {stable_mosaic.version = 11 : i64} {
  func.func @_ce_kernel(%arg0: i32, %arg1: i32, %arg2: memref<8x32xf32, #tpu.memory_space<vmem>>, %arg3: memref<8x1xf32, #tpu.memory_space<vmem>>, %arg4: memref<8x1xf32, #tpu.memory_space<vmem>>, %arg5: memref<8x1xf32, #tpu.memory_space<vmem>>, %arg6: memref<8x1xf32, #tpu.memory_space<vmem>>, %arg7: memref<8x1xf32, #tpu.memory_space<vmem>>) attributes {dimension_semantics = [#tpu.dimension_semantics<parallel>, #tpu.dimension_semantics<arbitrary>], iteration_bounds = array<i64: 1, 1>, scalar_prefetch = 0 : i64, scratch_operands = 3 : i64, tpu.core_type = #tpu.core_type<tc>, window_params = [{transform_indices = @transform_0, window_bounds = array<i64: 8, 32>}, {transform_indices = @transform_1, window_bounds = array<i64: 8, 1>}, {transform_indices = @transform_2, window_bounds = array<i64: 8, 1>}]} {
    %c0 = arith.constant 0 : index
    %c0_0 = arith.constant 0 : index
    %0 = vector.load %arg2[%c0, %c0_0] : memref<8x32xf32, #tpu.memory_space<vmem>>, vector<8x32xf32>
    %c0_i32 = arith.constant 0 : i32
    %1 = arith.cmpi eq, %arg1, %c0_i32 : i32
    %2 = arith.extui %1 : i1 to i32
    %c0_i32_1 = arith.constant 0 : i32
    %3 = arith.cmpi ne, %2, %c0_i32_1 : i32
    scf.if %3 {
      %cst_20 = arith.constant 0xFF800000 : f32
      %29 = vector.broadcast %cst_20 : f32 to vector<8x1xf32>
      %c0_21 = arith.constant 0 : index
      %c0_22 = arith.constant 0 : index
      %30 = vector.load %arg5[%c0_21, %c0_22] : memref<8x1xf32, #tpu.memory_space<vmem>>, vector<8x1xf32>
      tpu.vector_store %arg5[%c0_21, %c0_22], %29 {strides = array<i32>} : memref<8x1xf32, #tpu.memory_space<vmem>>, vector<8x1xf32>,
      %cst_23 = arith.constant 0.000000e+00 : f32
      %31 = vector.broadcast %cst_23 : f32 to vector<8x1xf32>
      %c0_24 = arith.constant 0 : index
      %c0_25 = arith.constant 0 : index
      %32 = vector.load %arg6[%c0_24, %c0_25] : memref<8x1xf32, #tpu.memory_space<vmem>>, vector<8x1xf32>
      tpu.vector_store %arg6[%c0_24, %c0_25], %31 {strides = array<i32>} : memref<8x1xf32, #tpu.memory_space<vmem>>, vector<8x1xf32>,
      %cst_26 = arith.constant 0.000000e+00 : f32
      %33 = vector.broadcast %cst_26 : f32 to vector<8x1xf32>
      %c0_27 = arith.constant 0 : index
      %c0_28 = arith.constant 0 : index
      %34 = vector.load %arg7[%c0_27, %c0_28] : memref<8x1xf32, #tpu.memory_space<vmem>>, vector<8x1xf32>
      tpu.vector_store %arg7[%c0_27, %c0_28], %33 {strides = array<i32>} : memref<8x1xf32, #tpu.memory_space<vmem>>, vector<8x1xf32>,
    } else {
    }
    %cst = arith.constant dense<0xFF800000> : vector<8xf32>
    %4 = vector.multi_reduction <maximumf>, %0, %cst [1] : vector<8x32xf32> to vector<8xf32>
    %5 = vector.shape_cast %4 : vector<8xf32> to vector<8x1xf32>
    %c0_2 = arith.constant 0 : index
    %c0_3 = arith.constant 0 : index
    %6 = vector.load %arg5[%c0_2, %c0_3] : memref<8x1xf32, #tpu.memory_space<vmem>>, vector<8x1xf32>
    %7 = arith.maximumf %6, %5 : vector<8x1xf32>
    %c0_4 = arith.constant 0 : index
    %c0_5 = arith.constant 0 : index
    %8 = vector.load %arg5[%c0_4, %c0_5] : memref<8x1xf32, #tpu.memory_space<vmem>>, vector<8x1xf32>
    %9 = arith.subf %8, %7 : vector<8x1xf32>
    %10 = math.exp %9 : vector<8x1xf32>
    %c0_6 = arith.constant 0 : index
    %c0_7 = arith.constant 0 : index
    %11 = vector.load %arg6[%c0_6, %c0_7] : memref<8x1xf32, #tpu.memory_space<vmem>>, vector<8x1xf32>
    %12 = arith.mulf %10, %11 : vector<8x1xf32>
    %13 = vector.broadcast %7 : vector<8x1xf32> to vector<8x32xf32>
    %14 = arith.subf %0, %13 : vector<8x32xf32>
    %15 = math.exp %14 : vector<8x32xf32>
    %cst_8 = arith.constant dense<0.000000e+00> : vector<8xf32>
    %16 = vector.multi_reduction <add>, %15, %cst_8 [1] : vector<8x32xf32> to vector<8xf32>
    %17 = vector.shape_cast %16 : vector<8xf32> to vector<8x1xf32>
    %18 = arith.addf %12, %17 : vector<8x1xf32>
    %c0_9 = arith.constant 0 : index
    %c0_10 = arith.constant 0 : index
    %19 = vector.load %arg6[%c0_9, %c0_10] : memref<8x1xf32, #tpu.memory_space<vmem>>, vector<8x1xf32>
    tpu.vector_store %arg6[%c0_9, %c0_10], %18 {strides = array<i32>} : memref<8x1xf32, #tpu.memory_space<vmem>>, vector<8x1xf32>,
    %c0_11 = arith.constant 0 : index
    %c0_12 = arith.constant 0 : index
    %20 = vector.load %arg5[%c0_11, %c0_12] : memref<8x1xf32, #tpu.memory_space<vmem>>, vector<8x1xf32>
    tpu.vector_store %arg5[%c0_11, %c0_12], %7 {strides = array<i32>} : memref<8x1xf32, #tpu.memory_space<vmem>>, vector<8x1xf32>,
    %c0_13 = arith.constant 0 : index
    %c0_14 = arith.constant 0 : index
    %21 = vector.load %arg7[%c0_13, %c0_14] : memref<8x1xf32, #tpu.memory_space<vmem>>, vector<8x1xf32>
    %cst_15 = arith.constant dense<0.000000e+00> : vector<8xf32>
    %22 = vector.multi_reduction <add>, %0, %cst_15 [1] : vector<8x32xf32> to vector<8xf32>
    %23 = vector.shape_cast %22 : vector<8xf32> to vector<8x1xf32>
    %24 = arith.addf %21, %23 : vector<8x1xf32>
    %c0_16 = arith.constant 0 : index
    %c0_17 = arith.constant 0 : index
    %25 = vector.load %arg7[%c0_16, %c0_17] : memref<8x1xf32, #tpu.memory_space<vmem>>, vector<8x1xf32>
    tpu.vector_store %arg7[%c0_16, %c0_17], %24 {strides = array<i32>} : memref<8x1xf32, #tpu.memory_space<vmem>>, vector<8x1xf32>,
    %c0_i32_18 = arith.constant 0 : i32
    %26 = arith.cmpi eq, %arg1, %c0_i32_18 : i32
    %27 = arith.extui %26 : i1 to i32
    %c0_i32_19 = arith.constant 0 : i32
    %28 = arith.cmpi ne, %27, %c0_i32_19 : i32
    scf.if %28 {
      %c0_20 = arith.constant 0 : index
      %c0_21 = arith.constant 0 : index
      %29 = vector.load %arg5[%c0_20, %c0_21] : memref<8x1xf32, #tpu.memory_space<vmem>>, vector<8x1xf32>
      %c0_22 = arith.constant 0 : index
      %c0_23 = arith.constant 0 : index
      %30 = vector.load %arg6[%c0_22, %c0_23] : memref<8x1xf32, #tpu.memory_space<vmem>>, vector<8x1xf32>
      %31 = math.log %30 : vector<8x1xf32>
      %32 = arith.addf %29, %31 : vector<8x1xf32>
      %c0_24 = arith.constant 0 : index
      %c0_25 = arith.constant 0 : index
      %33 = vector.load %arg3[%c0_24, %c0_25] : memref<8x1xf32, #tpu.memory_space<vmem>>, vector<8x1xf32>
      %34 = arith.subf %33, %32 : vector<8x1xf32>
      %c0_26 = arith.constant 0 : index
      %c0_27 = arith.constant 0 : index
      %35 = vector.load %arg7[%c0_26, %c0_27] : memref<8x1xf32, #tpu.memory_space<vmem>>, vector<8x1xf32>
      %cst_28 = arith.constant 3.200000e+01 : f32
      %36 = vector.broadcast %cst_28 : f32 to vector<8x1xf32>
      %37 = arith.mulf %36, %32 : vector<8x1xf32>
      %38 = arith.subf %35, %37 : vector<8x1xf32>
      %cst_29 = arith.constant 0.793548405 : f32
      %39 = vector.broadcast %cst_29 : f32 to vector<8x1xf32>
      %40 = arith.mulf %39, %34 : vector<8x1xf32>
      %cst_30 = arith.constant 0.0064516128 : f32
      %41 = vector.broadcast %cst_30 : f32 to vector<8x1xf32>
      %42 = arith.mulf %41, %38 : vector<8x1xf32>
      %43 = arith.addf %40, %42 : vector<8x1xf32>
      %cst_31 = arith.constant 0.000000e+00 : f32
      %44 = vector.broadcast %cst_31 : f32 to vector<8x1xf32>
      %45 = arith.subf %44, %43 : vector<8x1xf32>
      %c0_32 = arith.constant 0 : index
      %c0_33 = arith.constant 0 : index
      %46 = vector.load %arg4[%c0_32, %c0_33] : memref<8x1xf32, #tpu.memory_space<vmem>>, vector<8x1xf32>
      tpu.vector_store %arg4[%c0_32, %c0_33], %45 {strides = array<i32>} : memref<8x1xf32, #tpu.memory_space<vmem>>, vector<8x1xf32>,
    } else {
    }
    return
  }
  func.func @transform_0(%arg0: i32, %arg1: i32) -> (i32, i32) {
    %c0_i32 = arith.constant 0 : i32
    return %arg0, %arg1 : i32, i32
  }
  func.func @transform_1(%arg0: i32, %arg1: i32) -> (i32, i32) {
    %c0_i32 = arith.constant 0 : i32
    %c0_i32_0 = arith.constant 0 : i32
    return %arg0, %c0_i32 : i32, i32
  }
  func.func @transform_2(%arg0: i32, %arg1: i32) -> (i32, i32) {
    %c0_i32 = arith.constant 0 : i32
    %c0_i32_0 = arith.constant 0 : i32
    return %arg0, %c0_i32 : i32, i32
  }
}

</mosaic_0001>

<llo_original>
// kernel: tpu_custom_call.1
$region0: #{tpu_custom_call.1}
  #allocation0 [shape = 'u32[]', space=smem, size = 0x4, offset = 0x4, fixed_abs, tag = 'smem constant byte address 0x4 - core index']
  #allocation1 [shape = 'u32[144,128]{1,0:T(1,128)}', space=vmem, size = 0x12000, scoped, tag = 'internal scratch']
  #allocation2 [shape = 'f32[8,1]{1,0:T(8,128)}', space=vmem, size = 0x1000, scoped, tag = 'scratch operand']
  #allocation3 [shape = 'f32[8,1]{1,0:T(8,128)}', space=vmem, size = 0x1000, scoped, tag = 'scratch operand']
  #allocation4 [shape = 'f32[8,1]{1,0:T(8,128)}', space=vmem, size = 0x1000, scoped, tag = 'scratch operand']
  %s0 = inlined_call_operand.vmem [shape: f32[8,32], index: 0, kind: input, shape index: {}]
  %s1 = inlined_call_operand.vmem [shape: f32[8,1], index: 1, kind: input, shape index: {}]
  %s2 = inlined_call_operand.vmem [shape: f32[8,1], index: 2, kind: output, shape index: {}]
  %s3 = sld [smem:[#allocation0]]
  $region26: #{tpu_custom_call.1} parent=0
    _
  %s5 = ssub.s32 1, %s3
  %s6 = scalar_select 0, %s5, %s3
  // Predicated region
  $region2: #{tpu_custom_call.1} parent=0 // pred_check
    _
  $region3: #{tpu_custom_call.1} parent=0 // pred_check_branch
    %8 = sbr.rel (0) target = $region5
  $region4: #{tpu_custom_call.1} parent=0 // pred_region
    _
  $region5: #{tpu_custom_call.1} parent=0 // pred_fallthru
    _
  // Predicated region
  $region6: #{tpu_custom_call.1} parent=0 // pred_check
    _
  $region7: #{tpu_custom_call.1} parent=0 // pred_check_branch
    %10 = sbr.rel (0) target = $region9
  $region8: #{tpu_custom_call.1} parent=0 // pred_region
    _
  $region9: #{tpu_custom_call.1} parent=0 // pred_fallthru
    _
  %v11 = vld [vmem:[%s0] sm:$0xff]
  %p12 = scmp.eq.s32.totalorder 0, 0
  // Predicated region
  $region10: #{tpu_custom_call.1} parent=0 // pred_check
    %p13 = pneg %p12
  $region11: #{tpu_custom_call.1} parent=0 // pred_check_branch
    %15 = sbr.rel (%p13) target = $region13
  $region12: #{tpu_custom_call.1} parent=0 // pred_region
    %vm16 = vcmask 7168
    %17 = vst.msk [vmem:[#allocation2] sm:$0xff] %vm16, -inf
    %18 = vst.msk [vmem:[#allocation3] sm:$0xff] %vm16, 0.0
    %19 = vst.msk [vmem:[#allocation4] sm:$0xff] %vm16, 0.0
  $region13: #{tpu_custom_call.1} parent=0 // pred_fallthru
    _
  %vm20 = vcmask 261120
  %v21 = vsel %vm20, %v11, -inf
  %22 = vmax.xlane.f32.xlu0 %v21
  %v23 = vpop.xlane.xlu0 %22
  %v24 = vld [vmem:[#allocation2] sm:$0xff]
  %v25 = vmax.f32 %v24, %v23
  %v26 = vsub.f32 %v24, %v25
  %v27 = vmul.f32 %v26, 1.442695
  %v28 = vpow.pop %v27
  %v29 = vld [vmem:[#allocation3] sm:$0xff]
  %v30 = vmul.f32 %v28, %v29
  %32 = vset.pattern.permute.xlu0 0
  %33 = vperm.xlu0 %32, %v25
  %v34 = vpop.permute.xlu0 %33
  %v36 = vsub.f32 %v11, %v34
  %v37 = vmul.f32 %v36, 1.442695
  %v38 = vpow.pop %v37
  %v39 = vsel %vm20, %v38, 0.0
  %40 = vadd.xlane.f32.xlu0 %v39
  %v41 = vpop.xlane.xlu0 %40
  %v42 = vadd.f32 %v30, %v41
  %vm43 = vcmask 7168
  %44 = vst.msk [vmem:[#allocation3] sm:$0xff] %vm43, %v42
  %45 = vst.msk [vmem:[#allocation2] sm:$0xff] %vm43, %v25
  %v46 = vld [vmem:[#allocation4] sm:$0xff]
  %v47 = vsel %vm20, %v11, 0.0
  %48 = vadd.xlane.f32.xlu0 %v47
  %v49 = vpop.xlane.xlu0 %48
  %v50 = vadd.f32 %v46, %v49
  %51 = vst.msk [vmem:[#allocation4] sm:$0xff] %vm43, %v50
  // Predicated region
  $region14: #{tpu_custom_call.1} parent=0 // pred_check
    %p52 = pneg %p12
  $region15: #{tpu_custom_call.1} parent=0 // pred_check_branch
    %54 = sbr.rel (%p52) target = $region17
  $region16: #{tpu_custom_call.1} parent=0 // pred_region
    %v55 = vld [vmem:[#allocation2] sm:$0xff]
    %v56 = vld [vmem:[#allocation3] sm:$0xff]
    %v57 = vlog2.pop %v56
    %v58 = vmul.f32 %v57, 0.6931472
    %v59 = vadd.f32 %v55, %v58
    %v60 = vld [vmem:[%s1] sm:$0xff]
    %v61 = vsub.f32 %v60, %v59
    %v62 = vld [vmem:[#allocation4] sm:$0xff]
    %v63 = vmul.f32 %v59, 32.0
    %v64 = vsub.f32 %v62, %v63
    %v65 = vmul.f32 %v61, 0.7935484
    %v66 = vmul.f32 %v64, 0.006451613
    %v67 = vadd.f32 %v65, %v66
    %v68 = vsub.f32 0.0, %v67
    %69 = vst.msk [vmem:[%s2] sm:$0xff] %vm43, %v68
  $region17: #{tpu_custom_call.1} parent=0 // pred_fallthru
    _
  // Predicated region
  $region18: #{tpu_custom_call.1} parent=0 // pred_check
    _
  $region19: #{tpu_custom_call.1} parent=0 // pred_check_branch
    %71 = sbr.rel (0) target = $region21
  $region20: #{tpu_custom_call.1} parent=0 // pred_region
    _
  $region21: #{tpu_custom_call.1} parent=0 // pred_fallthru
    _
  // Predicated region
  $region22: #{tpu_custom_call.1} parent=0 // pred_check
    _
  $region23: #{tpu_custom_call.1} parent=0 // pred_check_branch
    %73 = sbr.rel (0) target = $region25
  $region24: #{tpu_custom_call.1} parent=0 // pred_region
    _
  $region25: #{tpu_custom_call.1} parent=0 // pred_fallthru
    _

</llo_original>
